<compile_context>
chip_gen: v6e
topology: v6e:2x2x1
jax: 0.10.0
libtpu: 0.0.40
codegen_flags: <defaults>
</compile_context>

<pallas_src>
import functools

import jax
import jax.numpy as jnp
import numpy as np
from jax.experimental import pallas as pl
from jax.experimental.pallas import tpu as pltpu


def _upsample_kernel(x_ref, r_ref, o_ref):
    # x_ref: (tm, W)  r_ref: (W, sh*Wo) one-hot, same dtype as x  o_ref: (tm, sh*Wo)
    y = x_ref[...] + 3.0                       # add in the input's native dtype
    z = jnp.dot(y, r_ref[...], preferred_element_type=jnp.float32)  # exact gather
    o_ref[...] = z.astype(o_ref.dtype)


@functools.lru_cache(maxsize=None)
def _col_selection(W, sw, sh, dtype_name):
    """Cached (W, sh*W*sw) one-hot selection: columns ordered (row-replica r, wo)."""
    Wo = W * sw
    src_w = (np.arange(Wo) * W) // Wo                     # PyTorch 'nearest' rule
    sel = (src_w[None, :] == np.arange(W)[:, None]).astype(np.float32)   # (W, Wo)
    tiled = np.tile(sel, (1, sh))                         # (W, sh*Wo)
    return jnp.asarray(tiled, dtype=dtype_name)           # 0/1 exact in any float dtype


def _vmem_budget_bytes():
    """Conservative per-kernel VMEM working-set budget (generation aware)."""
    try:
        cap = pltpu.get_tpu_info().vmem_capacity_bytes
        return max(cap // 8, 4 << 20)        # 16 MiB on 128-MiB parts, 8 MiB on v7x
    except Exception:
        return 8 << 20                       # safe under every scoped default
def _is_two_core_part():
    try:
        return "v7" in jax.devices()[0].device_kind.lower()
    except Exception:
        return False


def _pick_row_block(M, in_row_bytes, out_row_bytes, r_bytes, budget, two_core):
    """Largest row block whose double-buffered in+out tiles (+R) fit the budget."""
    per_row = 2 * (in_row_bytes + out_row_bytes)          # double-buffered in + out
    budget = max(budget - 2 * r_bytes, per_row * 8)
    if M * per_row <= budget:
        if two_core and M % 16 == 0 and M >= 16:
            return M // 2                                 # one block per v7x TC
        return M                                          # single grid step (v5e/v6e)
    if M % 8 != 0:
        # TODO(synk): pad rows to a multiple of 8 for very large non-8-divisible M.
        return M
    tm = max((budget // per_row) // 8 * 8, 8)
    while M % tm != 0:
        tm -= 8
    return tm


def upsample_model2(x, scale_factor):
    """Equivalent of TestUpsampleModel2.forward: F.upsample(x + 3, scale_factor)."""
    if isinstance(scale_factor, (tuple, list)):
        sh_f, sw_f = scale_factor[0], scale_factor[1]
    else:
        sh_f = sw_f = scale_factor
    sh, sw = int(sh_f), int(sw_f)
    assert sh == sh_f and sw == sw_f and sh >= 1 and sw >= 1, \
        "integer scale factors only"
    # TODO(synk): non-integer scale factors (PyTorch floor-based output size) unsupported.

    N, C, H, W = x.shape
    Ho, Wo = H * sh, W * sw
    M, K, Ncol = N * C * H, W, sh * Wo
    itemsize = jnp.dtype(x.dtype).itemsize

    r2 = _col_selection(W, sw, sh, jnp.dtype(x.dtype).name)   # (K, Ncol), cached
    x2 = x.reshape(M, K)                                      # free, contiguous

    tm = _pick_row_block(M, K * itemsize, Ncol * itemsize, K * Ncol * itemsize,
                         _vmem_budget_bytes(), _is_two_core_part())
    if M % tm != 0:
        tm = M
    grid = (M // tm,)

    bytes_accessed = (M * K + M * Ncol + K * Ncol) * itemsize
    flops = M * K + 2 * M * K * Ncol

    out2 = pl.pallas_call(
        _upsample_kernel,
        out_shape=jax.ShapeDtypeStruct((M, Ncol), x.dtype),
        grid=grid,
        in_specs=[
            pl.BlockSpec((tm, K), lambda i: (i, 0)),
            pl.BlockSpec((K, Ncol), lambda i: (0, 0)),
        ],
        out_specs=pl.BlockSpec((tm, Ncol), lambda i: (i, 0)),
        compiler_params=pltpu.CompilerParams(
            dimension_semantics=("parallel",)),
        cost_estimate=pl.CostEstimate(
            flops=flops, transcendentals=0, bytes_accessed=bytes_accessed),
    )(x2, r2)

    # (N*C*H, sh*Wo) row-major == (N, C, H, sh, Wo) == (N, C, Ho, Wo): free reshape.
    return out2.reshape(N, C, Ho, Wo)


if __name__ == "__main__":
    key = jax.random.PRNGKey(0)
    N, C, H, W = 2, 4, 16, 16
    scale_factor = 2
    x = jax.random.normal(key, (N, C, H, W), dtype=jnp.float32)

    z = jax.block_until_ready(upsample_model2(x, scale_factor))

    # Plain-JAX reference (nearest upsample with integer scale).
    y = x + 3.0
    ref = jnp.repeat(jnp.repeat(y, scale_factor, axis=2), scale_factor, axis=3)
    assert z.shape == (N, C, H * scale_factor, W * scale_factor)
    assert jnp.allclose(z, ref, atol=1e-5, rtol=1e-6)
    print("KERNEL_OK")
</pallas_src>

<mosaic_0001>
module attributes {stable_mosaic.version = 11 : i64} {
  func.func @_upsample_kernel(%arg0: i32, %arg1: memref<128x16xf32, #tpu.memory_space<vmem>>, %arg2: memref<16x64xf32, #tpu.memory_space<vmem>>, %arg3: memref<128x64xf32, #tpu.memory_space<vmem>>) attributes {dimension_semantics = [#tpu.dimension_semantics<parallel>], iteration_bounds = array<i64: 1>, scalar_prefetch = 0 : i64, scratch_operands = 0 : i64, tpu.core_type = #tpu.core_type<tc>, window_params = [{transform_indices = @transform_0, window_bounds = array<i64: 128, 16>}, {pipeline_mode = #tpu.pipeline_mode<synchronous>, transform_indices = @transform_1, window_bounds = array<i64: 16, 64>}, {transform_indices = @transform_2, window_bounds = array<i64: 128, 64>}]} {
    %c0 = arith.constant 0 : index
    %c0_0 = arith.constant 0 : index
    %0 = vector.load %arg1[%c0, %c0_0] : memref<128x16xf32, #tpu.memory_space<vmem>>, vector<128x16xf32>
    %cst = arith.constant 3.000000e+00 : f32
    %1 = vector.broadcast %cst : f32 to vector<128x16xf32>
    %2 = arith.addf %0, %1 : vector<128x16xf32>
    %c0_1 = arith.constant 0 : index
    %c0_2 = arith.constant 0 : index
    %3 = vector.load %arg2[%c0_1, %c0_2] : memref<16x64xf32, #tpu.memory_space<vmem>>, vector<16x64xf32>
    %cst_3 = arith.constant dense<0.000000e+00> : vector<128x64xf32>
    %4 = tpu.matmul %2, %3, %cst_3 {dimension_numbers = #tpu.dot_dimension_numbers<[1], [0], [0], [1], [0, 0, 1, 1], [], []>} : vector<128x16xf32>, vector<16x64xf32>, vector<128x64xf32> -> vector<128x64xf32>
    %c0_4 = arith.constant 0 : index
    %c0_5 = arith.constant 0 : index
    %5 = vector.load %arg3[%c0_4, %c0_5] : memref<128x64xf32, #tpu.memory_space<vmem>>, vector<128x64xf32>
    tpu.vector_store %arg3[%c0_4, %c0_5], %4 {strides = array<i32>} : memref<128x64xf32, #tpu.memory_space<vmem>>, vector<128x64xf32>,
    return
  }
  func.func @transform_0(%arg0: i32) -> (i32, i32) {
    %c0_i32 = arith.constant 0 : i32
    %c0_i32_0 = arith.constant 0 : i32
    return %arg0, %c0_i32 : i32, i32
  }
  func.func @transform_1(%arg0: i32) -> (i32, i32) {
    %c0_i32 = arith.constant 0 : i32
    %c0_i32_0 = arith.constant 0 : i32
    %c0_i32_1 = arith.constant 0 : i32
    return %c0_i32, %c0_i32_0 : i32, i32
  }
  func.func @transform_2(%arg0: i32) -> (i32, i32) {
    %c0_i32 = arith.constant 0 : i32
    %c0_i32_0 = arith.constant 0 : i32
    return %arg0, %c0_i32 : i32, i32
  }
}

</mosaic_0001>

<llo_original>
// kernel: tpu_custom_call.1
$region0: #{tpu_custom_call.1}
  #allocation0 [shape = 'u32[]', space=smem, size = 0x4, offset = 0x4, fixed_abs, tag = 'smem constant byte address 0x4 - core index']
  #allocation1 [shape = 'u32[144,128]{1,0:T(1,128)}', space=vmem, size = 0x12000, scoped, tag = 'internal scratch']
  %s0 = inlined_call_operand.vmem [shape: f32[128,16], index: 0, kind: input, shape index: {}]
  %s1 = inlined_call_operand.vmem [shape: f32[16,64], index: 1, kind: input, shape index: {}]
  %s2 = inlined_call_operand.vmem [shape: f32[128,64], index: 2, kind: output, shape index: {}]
  %s3 = sld [smem:[#allocation0]]
  $region18: #{tpu_custom_call.1} parent=0
    _
  %s5 = ssub.s32 1, %s3
  %s6 = scalar_select 0, %s5, %s3
  // Predicated region
  $region2: #{tpu_custom_call.1} parent=0 // pred_check
    _
  $region3: #{tpu_custom_call.1} parent=0 // pred_check_branch
    %8 = sbr.rel (0) target = $region5
  $region4: #{tpu_custom_call.1} parent=0 // pred_region
    _
  $region5: #{tpu_custom_call.1} parent=0 // pred_fallthru
    _
  // Predicated region
  $region6: #{tpu_custom_call.1} parent=0 // pred_check
    _
  $region7: #{tpu_custom_call.1} parent=0 // pred_check_branch
    %10 = sbr.rel (0) target = $region9
  $region8: #{tpu_custom_call.1} parent=0 // pred_region
    _
  $region9: #{tpu_custom_call.1} parent=0 // pred_fallthru
    _
  %v11 = vld [vmem:[%s0] sm:$0xff]
  %v12 = vld [vmem:[%s0 + $0x8] sm:$0xff]
  %v13 = vld [vmem:[%s0 + $0x10] sm:$0xff]
  %v14 = vld [vmem:[%s0 + $0x18] sm:$0xff]
  %v15 = vld [vmem:[%s0 + $0x20] sm:$0xff]
  %v16 = vld [vmem:[%s0 + $0x28] sm:$0xff]
  %v17 = vld [vmem:[%s0 + $0x30] sm:$0xff]
  %v18 = vld [vmem:[%s0 + $0x38] sm:$0xff]
  %v19 = vld [vmem:[%s0 + $0x40] sm:$0xff]
  %v20 = vld [vmem:[%s0 + $0x48] sm:$0xff]
  %v21 = vld [vmem:[%s0 + $0x50] sm:$0xff]
  %v22 = vld [vmem:[%s0 + $0x58] sm:$0xff]
  %v23 = vld [vmem:[%s0 + $0x60] sm:$0xff]
  %v24 = vld [vmem:[%s0 + $0x68] sm:$0xff]
  %v25 = vld [vmem:[%s0 + $0x70] sm:$0xff]
  %v26 = vld [vmem:[%s0 + $0x78] sm:$0xff]
  %v27 = vadd.f32 %v11, 3.0
  %v28 = vadd.f32 %v12, 3.0
  %v29 = vadd.f32 %v13, 3.0
  %v30 = vadd.f32 %v14, 3.0
  %v31 = vadd.f32 %v15, 3.0
  %v32 = vadd.f32 %v16, 3.0
  %v33 = vadd.f32 %v17, 3.0
  %v34 = vadd.f32 %v18, 3.0
  %v35 = vadd.f32 %v19, 3.0
  %v36 = vadd.f32 %v20, 3.0
  %v37 = vadd.f32 %v21, 3.0
  %v38 = vadd.f32 %v22, 3.0
  %v39 = vadd.f32 %v23, 3.0
  %v40 = vadd.f32 %v24, 3.0
  %v41 = vadd.f32 %v25, 3.0
  %v42 = vadd.f32 %v26, 3.0
  %v43 = vld [vmem:[%s1] sm:$0xff]
  %v44 = vld [vmem:[%s1 + $0x8] sm:$0xff]
  %vm45 = vcmask 130048
  %v47 = vsel %vm45, %v27, 0
  %v50 = vsel %vm45, %v28, 0
  %v53 = vsel %vm45, %v29, 0
  %v56 = vsel %vm45, %v30, 0
  %v59 = vsel %vm45, %v31, 0
  %v62 = vsel %vm45, %v32, 0
  %v65 = vsel %vm45, %v33, 0
  %v68 = vsel %vm45, %v34, 0
  %v71 = vsel %vm45, %v35, 0
  %v74 = vsel %vm45, %v36, 0
  %v77 = vsel %vm45, %v37, 0
  %v80 = vsel %vm45, %v38, 0
  %v83 = vsel %vm45, %v39, 0
  %v86 = vsel %vm45, %v40, 0
  %v89 = vsel %vm45, %v41, 0
  %v92 = vsel %vm45, %v42, 0
  %94 = vmatprep.subr.mxu0 0.0
  %95 = vmatpush1.msra.mxu0 0.0
  %96 = vmatprep.subr.mxu0 0.0
  %97 = vmatpush1.msra.mxu0 0.0
  %98 = vmatprep.subr.mxu0 0.0
  %99 = vmatpush1.msra.mxu0 0.0
  %100 = vmatprep.subr.mxu0 0.0
  %101 = vmatpush1.msra.mxu0 0.0
  %102 = vmatprep.subr.mxu0 0.0
  %103 = vmatpush1.msra.mxu0 0.0
  %104 = vmatprep.subr.mxu0 0.0
  %105 = vmatpush1.msra.mxu0 0.0
  %106 = vmatprep.subr.mxu0 0.0
  %107 = vmatpush1.msra.mxu0 0.0
  %108 = vmatprep.subr.mxu0 0.0
  %109 = vmatpush1.msra.mxu0 0.0
  %110 = vmatprep.subr.mxu0 0.0
  %111 = vmatpush1.msra.mxu0 0.0
  %112 = vmatprep.subr.mxu0 0.0
  %113 = vmatpush1.msra.mxu0 0.0
  %114 = vmatprep.subr.mxu0 0.0
  %115 = vmatpush1.msra.mxu0 0.0
  %116 = vmatprep.subr.mxu0 0.0
  %117 = vmatpush1.msra.mxu0 0.0
  %118 = vmatprep.subr.mxu0 0.0
  %119 = vmatpush1.msra.mxu0 0.0
  %120 = vmatprep.subr.mxu0 0.0
  %121 = vmatpush1.msra.mxu0 0.0
  %122 = vmatprep.subr.mxu0 0.0
  %123 = vmatpush1.msra.mxu0 %v44
  %124 = vmatprep.subr.mxu0 0.0
  %125 = vmatpush1.msra.mxu0 %v43
  %126 = vmatprep.subr.mxu0 0.0
  %127 = vmatpush2.msra.mxu0 0.0
  %128 = vmatprep.subr.mxu0 0.0
  %129 = vmatpush2.msra.mxu0 0.0
  %130 = vmatprep.subr.mxu0 0.0
  %131 = vmatpush2.msra.mxu0 0.0
  %132 = vmatprep.subr.mxu0 0.0
  %133 = vmatpush2.msra.mxu0 0.0
  %134 = vmatprep.subr.mxu0 0.0
  %135 = vmatpush2.msra.mxu0 0.0
  %136 = vmatprep.subr.mxu0 0.0
  %137 = vmatpush2.msra.mxu0 0.0
  %138 = vmatprep.subr.mxu0 0.0
  %139 = vmatpush2.msra.mxu0 0.0
  %140 = vmatprep.subr.mxu0 0.0
  %141 = vmatpush2.msra.mxu0 0.0
  %142 = vmatprep.subr.mxu0 0.0
  %143 = vmatpush2.msra.mxu0 0.0
  %144 = vmatprep.subr.mxu0 0.0
  %145 = vmatpush2.msra.mxu0 0.0
  %146 = vmatprep.subr.mxu0 0.0
  %147 = vmatpush2.msra.mxu0 0.0
  %148 = vmatprep.subr.mxu0 0.0
  %149 = vmatpush2.msra.mxu0 0.0
  %150 = vmatprep.subr.mxu0 0.0
  %151 = vmatpush2.msra.mxu0 0.0
  %152 = vmatprep.subr.mxu0 0.0
  %153 = vmatpush2.msra.mxu0 0.0
  %154 = vmatprep.subr.mxu0 0.0
  %155 = vmatpush2.msra.mxu0 0.0
  %156 = vmatprep.subr.mxu0 0.0
  %157 = vmatpush2.msra.mxu0 0.0
  %158 = vmatprep.mubr.f32.mxu0 0.0
  %159 = vmatmul.mubr.f32.gmra.mxu0 %v47
  %v160 = vpop.f32.mrf.mxu0
  %v161 = vadd.f32 0.0, %v160
  %v162 = vpop.f32.mrf.mxu0
  %163 = vmatprep.mubr.f32.mxu0 0.0
  %164 = vmatmul.mubr.f32.gmra.mxu0 %v50
  %v165 = vpop.f32.mrf.mxu0
  %v166 = vadd.f32 0.0, %v165
  %v167 = vpop.f32.mrf.mxu0
  %168 = vmatprep.mubr.f32.mxu0 0.0
  %169 = vmatmul.mubr.f32.gmra.mxu0 %v53
  %v170 = vpop.f32.mrf.mxu0
  %v171 = vadd.f32 0.0, %v170
  %v172 = vpop.f32.mrf.mxu0
  %173 = vmatprep.mubr.f32.mxu0 0.0
  %174 = vmatmul.mubr.f32.gmra.mxu0 %v56
  %v175 = vpop.f32.mrf.mxu0
  %v176 = vadd.f32 0.0, %v175
  %v177 = vpop.f32.mrf.mxu0
  %178 = vmatprep.mubr.f32.mxu0 0.0
  %179 = vmatmul.mubr.f32.gmra.mxu0 %v59
  %v180 = vpop.f32.mrf.mxu0
  %v181 = vadd.f32 0.0, %v180
  %v182 = vpop.f32.mrf.mxu0
  %183 = vmatprep.mubr.f32.mxu0 0.0
  %184 = vmatmul.mubr.f32.gmra.mxu0 %v62
  %v185 = vpop.f32.mrf.mxu0
  %v186 = vadd.f32 0.0, %v185
  %v187 = vpop.f32.mrf.mxu0
  %188 = vmatprep.mubr.f32.mxu0 0.0
  %189 = vmatmul.mubr.f32.gmra.mxu0 %v65
  %v190 = vpop.f32.mrf.mxu0
  %v191 = vadd.f32 0.0, %v190
  %v192 = vpop.f32.mrf.mxu0
  %193 = vmatprep.mubr.f32.mxu0 0.0
  %194 = vmatmul.mubr.f32.gmra.mxu0 %v68
  %v195 = vpop.f32.mrf.mxu0
  %v196 = vadd.f32 0.0, %v195
  %v197 = vpop.f32.mrf.mxu0
  %198 = vmatprep.mubr.f32.mxu0 0.0
  %199 = vmatmul.mubr.f32.gmra.mxu0 %v71
  %v200 = vpop.f32.mrf.mxu0
  %v201 = vadd.f32 0.0, %v200
  %v202 = vpop.f32.mrf.mxu0
  %203 = vmatprep.mubr.f32.mxu0 0.0
  %204 = vmatmul.mubr.f32.gmra.mxu0 %v74
  %v205 = vpop.f32.mrf.mxu0
  %v206 = vadd.f32 0.0, %v205
  %v207 = vpop.f32.mrf.mxu0
  %208 = vmatprep.mubr.f32.mxu0 0.0
  %209 = vmatmul.mubr.f32.gmra.mxu0 %v77
  %v210 = vpop.f32.mrf.mxu0
  %v211 = vadd.f32 0.0, %v210
  %v212 = vpop.f32.mrf.mxu0
  %213 = vmatprep.mubr.f32.mxu0 0.0
  %214 = vmatmul.mubr.f32.gmra.mxu0 %v80
  %v215 = vpop.f32.mrf.mxu0
  %v216 = vadd.f32 0.0, %v215
  %v217 = vpop.f32.mrf.mxu0
  %218 = vmatprep.mubr.f32.mxu0 0.0
  %219 = vmatmul.mubr.f32.gmra.mxu0 %v83
  %v220 = vpop.f32.mrf.mxu0
  %v221 = vadd.f32 0.0, %v220
  %v222 = vpop.f32.mrf.mxu0
  %223 = vmatprep.mubr.f32.mxu0 0.0
  %224 = vmatmul.mubr.f32.gmra.mxu0 %v86
  %v225 = vpop.f32.mrf.mxu0
  %v226 = vadd.f32 0.0, %v225
  %v227 = vpop.f32.mrf.mxu0
  %228 = vmatprep.mubr.f32.mxu0 0.0
  %229 = vmatmul.mubr.f32.gmra.mxu0 %v89
  %v230 = vpop.f32.mrf.mxu0
  %v231 = vadd.f32 0.0, %v230
  %v232 = vpop.f32.mrf.mxu0
  %233 = vmatprep.mubr.f32.mxu0 0.0
  %234 = vmatmul.mubr.f32.gmra.mxu0 %v92
  %v235 = vpop.f32.mrf.mxu0
  %v236 = vadd.f32 0.0, %v235
  %v237 = vpop.f32.mrf.mxu0
  %238 = vdwg.mxu0
  %vm239 = vcmask 523264
  %240 = vst.msk [vmem:[%s2] sm:$0xff] %vm239, %v161
  %241 = vst.msk [vmem:[%s2 + $0x8] sm:$0xff] %vm239, %v166
  %242 = vst.msk [vmem:[%s2 + $0x10] sm:$0xff] %vm239, %v171
  %243 = vst.msk [vmem:[%s2 + $0x18] sm:$0xff] %vm239, %v176
  %244 = vst.msk [vmem:[%s2 + $0x20] sm:$0xff] %vm239, %v181
  %245 = vst.msk [vmem:[%s2 + $0x28] sm:$0xff] %vm239, %v186
  %246 = vst.msk [vmem:[%s2 + $0x30] sm:$0xff] %vm239, %v191
  %247 = vst.msk [vmem:[%s2 + $0x38] sm:$0xff] %vm239, %v196
  %248 = vst.msk [vmem:[%s2 + $0x40] sm:$0xff] %vm239, %v201
  %249 = vst.msk [vmem:[%s2 + $0x48] sm:$0xff] %vm239, %v206
  %250 = vst.msk [vmem:[%s2 + $0x50] sm:$0xff] %vm239, %v211
  %251 = vst.msk [vmem:[%s2 + $0x58] sm:$0xff] %vm239, %v216
  %252 = vst.msk [vmem:[%s2 + $0x60] sm:$0xff] %vm239, %v221
  %253 = vst.msk [vmem:[%s2 + $0x68] sm:$0xff] %vm239, %v226
  %254 = vst.msk [vmem:[%s2 + $0x70] sm:$0xff] %vm239, %v231
  %255 = vst.msk [vmem:[%s2 + $0x78] sm:$0xff] %vm239, %v236
  // Predicated region
  $region10: #{tpu_custom_call.1} parent=0 // pred_check
    _
  $region11: #{tpu_custom_call.1} parent=0 // pred_check_branch
    %257 = sbr.rel (0) target = $region13
  $region12: #{tpu_custom_call.1} parent=0 // pred_region
    _
  $region13: #{tpu_custom_call.1} parent=0 // pred_fallthru
    _
  // Predicated region
  $region14: #{tpu_custom_call.1} parent=0 // pred_check
    _
  $region15: #{tpu_custom_call.1} parent=0 // pred_check_branch
    %259 = sbr.rel (0) target = $region17
  $region16: #{tpu_custom_call.1} parent=0 // pred_region
    _
  $region17: #{tpu_custom_call.1} parent=0 // pred_fallthru
    _

</llo_original>
